<compile_context>
chip_gen: v5e
topology: v5e:2x2
jax: 0.10.0
libtpu: 0.0.40
codegen_flags: <defaults>
</compile_context>

<pallas_src>
import functools

import jax
import jax.numpy as jnp
import numpy as np
from jax.experimental import pallas as pl
from jax.experimental.pallas import tpu as pltpu

# ---------------- config (plays the role of `opt`) ----------------
MIN_VARIANCE = 1e-3      # opt['min_variance']
MNV_INIT = 1e-2          # opt['mnv_init']   (multiplicative noise variance alpha)
# opt['prior_precision'], opt['prior_mean'], opt['model_kl_div_weight'] -> KL term only.

_INV_SQRT_2PI = 1.0 / np.sqrt(2.0 * np.pi)
_INV_SQRT_2 = 1.0 / np.sqrt(2.0)
_VAR_EPS = 1e-30         # guard for rsqrt(0) in zero-variance / padded output columns


def _round_up(x, m):
    return ((x + m - 1) // m) * m


# ---------------- Pallas kernel: fused LinearMNCL + ADF-ReLU ----------------
def _fcblock_kernel(alpha, min_variance, mean_ref, var_ref, w_ref,
                    out_mean_ref, out_var_ref):
    m = mean_ref[...]            # (TILE_B, IN)
    v = var_ref[...]             # (TILE_B, IN)
    w = w_ref[...]               # (IN, OUT_PAD)  == W^T (zero-padded columns)

    # Square the single resident weight tile on the VPU (hidden under MXU work).
    wsq = w * w                  # (IN, OUT_PAD)  == (W^2)^T

    # LinearMNCL moment propagation: 2 MXU matmuls (variance matmuls fused).
    lin_mean = jnp.dot(m, w, preferred_element_type=jnp.float32)
    var_in = (1.0 + alpha) * v + alpha * (m * m)          # VPU, (TILE_B, IN)
    lin_var = jnp.dot(var_in, wsq, preferred_element_type=jnp.float32)

    # ADF ReLU (moment matching of max(0, x) for x ~ N(lin_mean, lin_var)).
    # One rsqrt instead of sqrt + divide; eps guard keeps padded lanes finite.
    lin_var_safe = jnp.maximum(lin_var, _VAR_EPS)
    inv_std = jax.lax.rsqrt(lin_var_safe)
    std = lin_var_safe * inv_std                          # == sqrt(lin_var)
    ratio = lin_mean * inv_std                            # == lin_mean / std
    pdf = jnp.exp(-0.5 * ratio * ratio) * _INV_SQRT_2PI
    cdf = 0.5 * (1.0 + jax.lax.erf(ratio * _INV_SQRT_2))
    relu_mean = lin_mean * cdf + std * pdf
    relu_var = ((lin_mean * lin_mean + lin_var) * cdf
                + lin_mean * std * pdf
                - relu_mean * relu_mean)

    out_mean_ref[...] = relu_mean.astype(out_mean_ref.dtype)
    # keep_variance_fn = clamp(min=min_variance)
    out_var_ref[...] = jnp.maximum(relu_var, min_variance).astype(out_var_ref.dtype)


def fcblock_forward(mean, var, weight, alpha, *, min_variance=MIN_VARIANCE,
                    max_tile_b=256):
    """mean, var: (B, IN) float32;  weight: (OUT, IN);  alpha: scalar mnv."""
    B, IN = mean.shape
    OUT = weight.shape[0]

    # ---- layout plumbing (plain JAX, outside the kernel) ----
    # Lane-dense output: pad OUT up to a multiple of 128 with zero weight columns.
    OUT_PAD = _round_up(OUT, 128)
    w_t = weight.T.astype(jnp.float32)                    # (IN, OUT)
    if OUT_PAD != OUT:
        w_t = jnp.pad(w_t, ((0, 0), (0, OUT_PAD - OUT)))  # (IN, OUT_PAD)

    # Batch tiling: multiple-of-8 tile, grid axis marked "parallel" (2 TCs on v7x).
    TILE_B = min(max_tile_b, _round_up(B, 8))
    B_PAD = _round_up(B, TILE_B)
    mean_p = mean.astype(jnp.float32)
    var_p = var.astype(jnp.float32)
    if B_PAD != B:
        mean_p = jnp.pad(mean_p, ((0, B_PAD - B), (0, 0)))
        var_p = jnp.pad(var_p, ((0, B_PAD - B), (0, 0)))

    kernel = functools.partial(_fcblock_kernel, float(alpha), float(min_variance))

    out_mean, out_var = pl.pallas_call(
        kernel,
        grid=(B_PAD // TILE_B,),
        in_specs=[
            pl.BlockSpec((TILE_B, IN), lambda i: (i, 0)),      # mean
            pl.BlockSpec((TILE_B, IN), lambda i: (i, 0)),      # var
            pl.BlockSpec((IN, OUT_PAD), lambda i: (0, 0)),     # W^T (resident)
        ],
        out_specs=[
            pl.BlockSpec((TILE_B, OUT_PAD), lambda i: (i, 0)),
            pl.BlockSpec((TILE_B, OUT_PAD), lambda i: (i, 0)),
        ],
        out_shape=[
            jax.ShapeDtypeStruct((B_PAD, OUT_PAD), jnp.float32),
            jax.ShapeDtypeStruct((B_PAD, OUT_PAD), jnp.float32),
        ],
        compiler_params=pltpu.CompilerParams(
            dimension_semantics=("parallel",)),
    )(mean_p, var_p, w_t)

    # Strip batch / lane padding.
    return out_mean[:B, :OUT], out_var[:B, :OUT]


# ---------------- pure-JAX reference for verification ----------------
def fcblock_reference(mean, var, weight, alpha, *, min_variance=MIN_VARIANCE):
    lin_mean = mean @ weight.T
    lin_var = var @ (weight ** 2).T + (mean ** 2 + var) @ (alpha * weight ** 2).T
    std = jnp.sqrt(lin_var)
    r = lin_mean / std
    pdf = jnp.exp(-0.5 * r * r) * _INV_SQRT_2PI
    cdf = 0.5 * (1.0 + jax.lax.erf(r * _INV_SQRT_2))
    out_mean = lin_mean * cdf + std * pdf
    out_var = (lin_mean ** 2 + lin_var) * cdf + lin_mean * std * pdf - out_mean ** 2
    return out_mean, jnp.maximum(out_var, min_variance)


if __name__ == "__main__":
    # Small shapes consistent with the module: batch=8, in_channels=32, num_classes=16.
    B, IN, OUT = 8, 32, 16

    key = jax.random.PRNGKey(0)
    k_mean, k_var, k_w = jax.random.split(key, 3)

    x_mean = jax.random.normal(k_mean, (B, IN), dtype=jnp.float32)
    x_var = jax.random.uniform(k_var, (B, IN), dtype=jnp.float32,
                               minval=0.05, maxval=0.5)
    # Deterministic "Kaiming-ish" init for the LinearMNCL weight mean.
    weight = jax.random.normal(k_w, (OUT, IN), dtype=jnp.float32) * (1.0 / np.sqrt(IN))
    alpha = jnp.float32(MNV_INIT)  # multiplicative noise variance (mnv_init)

    out_mean, out_var = fcblock_forward(x_mean, x_var, weight, alpha)
    jax.block_until_ready((out_mean, out_var))

    ref_mean, ref_var = fcblock_reference(x_mean, x_var, weight, alpha)
    assert out_mean.shape == (B, OUT) and out_var.shape == (B, OUT)
    np.testing.assert_allclose(np.asarray(out_mean), np.asarray(ref_mean),
                               rtol=1e-5, atol=1e-5)
    np.testing.assert_allclose(np.asarray(out_var), np.asarray(ref_var),
                               rtol=1e-5, atol=1e-5)

    print("KERNEL_OK")
</pallas_src>

<mosaic_0001>
module attributes {stable_mosaic.version = 11 : i64} {
  func.func @_fcblock_kernel(%arg0: i32, %arg1: memref<8x32xf32, #tpu.memory_space<vmem>>, %arg2: memref<8x32xf32, #tpu.memory_space<vmem>>, %arg3: memref<32x128xf32, #tpu.memory_space<vmem>>, %arg4: memref<8x128xf32, #tpu.memory_space<vmem>>, %arg5: memref<8x128xf32, #tpu.memory_space<vmem>>) attributes {dimension_semantics = [#tpu.dimension_semantics<parallel>], iteration_bounds = array<i64: 1>, scalar_prefetch = 0 : i64, scratch_operands = 0 : i64, tpu.core_type = #tpu.core_type<tc>, window_params = [{transform_indices = @transform_0, window_bounds = array<i64: 8, 32>}, {transform_indices = @transform_1, window_bounds = array<i64: 8, 32>}, {pipeline_mode = #tpu.pipeline_mode<synchronous>, transform_indices = @transform_2, window_bounds = array<i64: 32, 128>}, {transform_indices = @transform_3, window_bounds = array<i64: 8, 128>}, {transform_indices = @transform_4, window_bounds = array<i64: 8, 128>}]} {
    %c0 = arith.constant 0 : index
    %c0_0 = arith.constant 0 : index
    %0 = vector.load %arg1[%c0, %c0_0] : memref<8x32xf32, #tpu.memory_space<vmem>>, vector<8x32xf32>
    %c0_1 = arith.constant 0 : index
    %c0_2 = arith.constant 0 : index
    %1 = vector.load %arg2[%c0_1, %c0_2] : memref<8x32xf32, #tpu.memory_space<vmem>>, vector<8x32xf32>
    %c0_3 = arith.constant 0 : index
    %c0_4 = arith.constant 0 : index
    %2 = vector.load %arg3[%c0_3, %c0_4] : memref<32x128xf32, #tpu.memory_space<vmem>>, vector<32x128xf32>
    %3 = arith.mulf %2, %2 : vector<32x128xf32>
    %cst = arith.constant dense<0.000000e+00> : vector<8x128xf32>
    %4 = tpu.matmul %0, %2, %cst {dimension_numbers = #tpu.dot_dimension_numbers<[1], [0], [0], [1], [0, 0, 1, 1], [], []>} : vector<8x32xf32>, vector<32x128xf32>, vector<8x128xf32> -> vector<8x128xf32>
    %cst_5 = arith.constant 1.010000e+00 : f32
    %5 = vector.broadcast %cst_5 : f32 to vector<8x32xf32>
    %6 = arith.mulf %5, %1 : vector<8x32xf32>
    %7 = arith.mulf %0, %0 : vector<8x32xf32>
    %cst_6 = arith.constant 0.00999999977 : f32
    %8 = vector.broadcast %cst_6 : f32 to vector<8x32xf32>
    %9 = arith.mulf %8, %7 : vector<8x32xf32>
    %10 = arith.addf %6, %9 : vector<8x32xf32>
    %cst_7 = arith.constant dense<0.000000e+00> : vector<8x128xf32>
    %11 = tpu.matmul %10, %3, %cst_7 {dimension_numbers = #tpu.dot_dimension_numbers<[1], [0], [0], [1], [0, 0, 1, 1], [], []>} : vector<8x32xf32>, vector<32x128xf32>, vector<8x128xf32> -> vector<8x128xf32>
    %cst_8 = arith.constant 1.000000e-30 : f32
    %12 = vector.broadcast %cst_8 : f32 to vector<8x128xf32>
    %13 = arith.maximumf %11, %12 : vector<8x128xf32>
    %14 = math.rsqrt %13 : vector<8x128xf32>
    %15 = arith.mulf %13, %14 : vector<8x128xf32>
    %16 = arith.mulf %4, %14 : vector<8x128xf32>
    %cst_9 = arith.constant -5.000000e-01 : f32
    %17 = vector.broadcast %cst_9 : f32 to vector<8x128xf32>
    %18 = arith.mulf %17, %16 : vector<8x128xf32>
    %19 = arith.mulf %18, %16 : vector<8x128xf32>
    %20 = math.exp %19 : vector<8x128xf32>
    %cst_10 = arith.constant 0.398942292 : f32
    %21 = vector.broadcast %cst_10 : f32 to vector<8x128xf32>
    %22 = arith.mulf %20, %21 : vector<8x128xf32>
    %cst_11 = arith.constant 0.707106769 : f32
    %23 = vector.broadcast %cst_11 : f32 to vector<8x128xf32>
    %24 = arith.mulf %16, %23 : vector<8x128xf32>
    %25 = math.erf %24 : vector<8x128xf32>
    %cst_12 = arith.constant 1.000000e+00 : f32
    %26 = vector.broadcast %cst_12 : f32 to vector<8x128xf32>
    %27 = arith.addf %26, %25 : vector<8x128xf32>
    %cst_13 = arith.constant 5.000000e-01 : f32
    %28 = vector.broadcast %cst_13 : f32 to vector<8x128xf32>
    %29 = arith.mulf %28, %27 : vector<8x128xf32>
    %30 = arith.mulf %4, %29 : vector<8x128xf32>
    %31 = arith.mulf %15, %22 : vector<8x128xf32>
    %32 = arith.addf %30, %31 : vector<8x128xf32>
    %33 = arith.mulf %4, %4 : vector<8x128xf32>
    %34 = arith.addf %33, %11 : vector<8x128xf32>
    %35 = arith.mulf %34, %29 : vector<8x128xf32>
    %36 = arith.mulf %4, %15 : vector<8x128xf32>
    %37 = arith.mulf %36, %22 : vector<8x128xf32>
    %38 = arith.addf %35, %37 : vector<8x128xf32>
    %39 = arith.mulf %32, %32 : vector<8x128xf32>
    %40 = arith.subf %38, %39 : vector<8x128xf32>
    %c0_14 = arith.constant 0 : index
    %c0_15 = arith.constant 0 : index
    %41 = vector.load %arg4[%c0_14, %c0_15] : memref<8x128xf32, #tpu.memory_space<vmem>>, vector<8x128xf32>
    tpu.vector_store %arg4[%c0_14, %c0_15], %32 {strides = array<i32>} : memref<8x128xf32, #tpu.memory_space<vmem>>, vector<8x128xf32>,
    %cst_16 = arith.constant 1.000000e-03 : f32
    %42 = vector.broadcast %cst_16 : f32 to vector<8x128xf32>
    %43 = arith.maximumf %40, %42 : vector<8x128xf32>
    %c0_17 = arith.constant 0 : index
    %c0_18 = arith.constant 0 : index
    %44 = vector.load %arg5[%c0_17, %c0_18] : memref<8x128xf32, #tpu.memory_space<vmem>>, vector<8x128xf32>
    tpu.vector_store %arg5[%c0_17, %c0_18], %43 {strides = array<i32>} : memref<8x128xf32, #tpu.memory_space<vmem>>, vector<8x128xf32>,
    return
  }
  func.func @transform_0(%arg0: i32) -> (i32, i32) {
    %c0_i32 = arith.constant 0 : i32
    %c0_i32_0 = arith.constant 0 : i32
    return %arg0, %c0_i32 : i32, i32
  }
  func.func @transform_1(%arg0: i32) -> (i32, i32) {
    %c0_i32 = arith.constant 0 : i32
    %c0_i32_0 = arith.constant 0 : i32
    return %arg0, %c0_i32 : i32, i32
  }
  func.func @transform_2(%arg0: i32) -> (i32, i32) {
    %c0_i32 = arith.constant 0 : i32
    %c0_i32_0 = arith.constant 0 : i32
    %c0_i32_1 = arith.constant 0 : i32
    return %c0_i32, %c0_i32_0 : i32, i32
  }
  func.func @transform_3(%arg0: i32) -> (i32, i32) {
    %c0_i32 = arith.constant 0 : i32
    %c0_i32_0 = arith.constant 0 : i32
    return %arg0, %c0_i32 : i32, i32
  }
  func.func @transform_4(%arg0: i32) -> (i32, i32) {
    %c0_i32 = arith.constant 0 : i32
    %c0_i32_0 = arith.constant 0 : i32
    return %arg0, %c0_i32 : i32, i32
  }
}

</mosaic_0001>

<llo_original>
// kernel: tpu_custom_call.1
$region0: #{tpu_custom_call.1}
  #allocation0 [shape = 'u32[]', space=smem, size = 0x4, offset = 0x4, fixed_abs, tag = 'smem constant byte address 0x4 - core index']
  #allocation1 [shape = 'u32[72,128]{1,0:T(1,128)}', space=vmem, size = 0x9000, scoped, tag = 'internal scratch']
  %s0 = inlined_call_operand.hbm [shape: f32[8,32], index: 0, kind: input, shape index: {}]
  %s1 = inlined_call_operand.hbm [shape: f32[8,32], index: 1, kind: input, shape index: {}]
  %s2 = inlined_call_operand.hbm [shape: f32[32,128], index: 2, kind: input, shape index: {}]
  %s3 = inlined_call_operand.hbm [shape: f32[8,128], index: 3, kind: output, shape index: {0}]
  %s4 = inlined_call_operand.hbm [shape: f32[8,128], index: 4, kind: output, shape index: {1}]
  %5 = xla_tuple %s3, %s4
  %s6 = sld [smem:[#allocation0]]
  $region42: #{tpu_custom_call.1} parent=0
    _
  %s8 = ssub.s32 1, %s6
  %s9 = scalar_select 0, %s8, %s6
  $region1: #{tpu_custom_call.1} parent=0
    #allocation2 [shape = 'u8[4096]{0}', space=vmem, size = 0x1000, scoped, tag = 'input window, operand 0, single buffered']
    #allocation3 [shape = 's32[1]{0}', space=sflag, size = 0x4, scoped, tag = 'scoped memory for tpu_custom_call.1']
    #allocation4 [shape = 's32[1]{0}', space=sflag, size = 0x4, scoped, tag = 'scoped memory for tpu_custom_call.1']
    #allocation5 [shape = 'u8[4096]{0}', space=vmem, size = 0x1000, scoped, tag = 'input window, operand 1, single buffered']
    #allocation6 [shape = 's32[1]{0}', space=sflag, size = 0x4, scoped, tag = 'scoped memory for tpu_custom_call.1']
    #allocation7 [shape = 'u8[16384]{0}', space=vmem, size = 0x4000, scoped, tag = 'input window, operand 2, single buffered']
    #allocation8 [shape = 'u8[4096]{0}', space=vmem, size = 0x1000, scoped, tag = 'output window, operand 0, single buffered']
    #allocation9 [shape = 'u8[4096]{0}', space=vmem, size = 0x1000, scoped, tag = 'output window, operand 1, single buffered']
    #allocation10 [shape = 's32[1]{0}', space=sflag, size = 0x4, scoped, tag = 'scoped memory for tpu_custom_call.1']
    %10 = vsyncpa [#allocation3], 0
    %11 = vsyncpa [#allocation6], 0
    %12 = vsyncpa [#allocation4], 0
    %13 = vsyncpa [#allocation10], 0
    // Predicated region
    $region2: #{tpu_custom_call.1} parent=1 // pred_check
      _
    $region3: #{tpu_custom_call.1} parent=1 // pred_check_branch
      %15 = sbr.rel (0) target = $region5
    $region4: #{tpu_custom_call.1} parent=1 // pred_region
      %17 = vsyncadd [#allocation3], 0
      %s19 = sshll.u32 %s0, 4
      %s20 = int_to_ptr.hbm [resolvable:$true] %s19
      %s21 = sshll.u32 [#allocation2], 4
      %s22 = int_to_ptr.vmem [resolvable:$true] %s21
      %24 = dma.hbm_to_vmem [thread:$0]  %s20, 128, %s22, [#allocation3]
    $region5: #{tpu_custom_call.1} parent=1 // pred_fallthru
      _
    // Predicated region
    $region6: #{tpu_custom_call.1} parent=1 // pred_check
      _
    $region7: #{tpu_custom_call.1} parent=1 // pred_check_branch
      %26 = sbr.rel (0) target = $region9
    $region8: #{tpu_custom_call.1} parent=1 // pred_region
      %28 = vsyncadd [#allocation6], 0
      %s30 = sshll.u32 %s1, 4
      %s31 = int_to_ptr.hbm [resolvable:$true] %s30
      %s32 = sshll.u32 [#allocation5], 4
      %s33 = int_to_ptr.vmem [resolvable:$true] %s32
      %35 = dma.hbm_to_vmem [thread:$0]  %s31, 128, %s33, [#allocation6]
    $region9: #{tpu_custom_call.1} parent=1 // pred_fallthru
      _
    // Predicated region
    $region10: #{tpu_custom_call.1} parent=1 // pred_check
      _
    $region11: #{tpu_custom_call.1} parent=1 // pred_check_branch
      %37 = sbr.rel (0) target = $region13
    $region12: #{tpu_custom_call.1} parent=1 // pred_region
      %39 = vsyncadd [#allocation6], 0
      %s40 = sshll.u32 %s2, 4
      %s41 = int_to_ptr.hbm [resolvable:$true] %s40
      %s42 = sshll.u32 [#allocation7], 4
      %s43 = int_to_ptr.vmem [resolvable:$true] %s42
      %48 = dma.hbm_to_vmem [thread:$0]  %s41, 512, %s43, [#allocation6], 128, 128, 8
    $region13: #{tpu_custom_call.1} parent=1 // pred_fallthru
      _
    // Predicated region
    $region14: #{tpu_custom_call.1} parent=1 // pred_check
      _
    $region15: #{tpu_custom_call.1} parent=1 // pred_check_branch
      %50 = sbr.rel (0) target = $region17
    $region16: #{tpu_custom_call.1} parent=1 // pred_region
      %52 = dma.done [#allocation3], 128
    $region17: #{tpu_custom_call.1} parent=1 // pred_fallthru
      _
    // Predicated region
    $region18: #{tpu_custom_call.1} parent=1 // pred_check
      _
    $region19: #{tpu_custom_call.1} parent=1 // pred_check_branch
      %54 = sbr.rel (0) target = $region21
    $region20: #{tpu_custom_call.1} parent=1 // pred_region
      %56 = dma.done [#allocation6], 128
    $region21: #{tpu_custom_call.1} parent=1 // pred_fallthru
      _
    // Predicated region
    $region22: #{tpu_custom_call.1} parent=1 // pred_check
      _
    $region23: #{tpu_custom_call.1} parent=1 // pred_check_branch
      %58 = sbr.rel (0) target = $region25
    $region24: #{tpu_custom_call.1} parent=1 // pred_region
      %60 = dma.done [#allocation6], 512
    $region25: #{tpu_custom_call.1} parent=1 // pred_fallthru
      _
    %v61 = vld [vmem:[#allocation2] sm:$0xff]
    %v62 = vld [vmem:[#allocation5] sm:$0xff]
    %v63 = vld [vmem:[#allocation7] sm:$0xff]
    %v64 = vld [vmem:[#allocation7 + $0x8] sm:$0xff]
    %v65 = vld [vmem:[#allocation7 + $0x10] sm:$0xff]
    %v66 = vld [vmem:[#allocation7 + $0x18] sm:$0xff]
    %v67 = vmul.f32 %v63, %v63
    %v68 = vmul.f32 %v64, %v64
    %v69 = vmul.f32 %v65, %v65
    %v70 = vmul.f32 %v66, %v66
    %vm71 = vcmask 261120
    %v73 = vsel %vm71, %v61, 0
    %75 = vmatpush.msra.mxu0 0.0
    %76 = vmatpush.msra.mxu0 0.0
    %77 = vmatpush.msra.mxu0 0.0
    %78 = vmatpush.msra.mxu0 0.0
    %79 = vmatpush.msra.mxu0 0.0
    %80 = vmatpush.msra.mxu0 0.0
    %81 = vmatpush.msra.mxu0 0.0
    %82 = vmatpush.msra.mxu0 0.0
    %83 = vmatpush.msra.mxu0 0.0
    %84 = vmatpush.msra.mxu0 0.0
    %85 = vmatpush.msra.mxu0 0.0
    %86 = vmatpush.msra.mxu0 0.0
    %87 = vmatpush.msra.mxu0 %v66
    %88 = vmatpush.msra.mxu0 %v65
    %89 = vmatpush.msra.mxu0 %v64
    %90 = vmatpush.msra.mxu0 %v63
    %91 = vmatmul.f32.gmra.mxu0 %v73
    %v92 = vpop.f32.mrf.mxu0
    %v93 = vadd.f32 0.0, %v92
    %94 = vdwg.mxu0
    %v95 = vmul.f32 %v62, 1.01
    %v96 = vmul.f32 %v61, %v61
    %v97 = vmul.f32 %v96, 0.01
    %v98 = vadd.f32 %v95, %v97
    %v100 = vsel %vm71, %v98, 0
    %102 = vmatpush.msra.mxu0 0.0
    %103 = vmatpush.msra.mxu0 0.0
    %104 = vmatpush.msra.mxu0 0.0
    %105 = vmatpush.msra.mxu0 0.0
    %106 = vmatpush.msra.mxu0 0.0
    %107 = vmatpush.msra.mxu0 0.0
    %108 = vmatpush.msra.mxu0 0.0
    %109 = vmatpush.msra.mxu0 0.0
    %110 = vmatpush.msra.mxu0 0.0
    %111 = vmatpush.msra.mxu0 0.0
    %112 = vmatpush.msra.mxu0 0.0
    %113 = vmatpush.msra.mxu0 0.0
    %114 = vmatpush.msra.mxu0 %v70
    %115 = vmatpush.msra.mxu0 %v69
    %116 = vmatpush.msra.mxu0 %v68
    %117 = vmatpush.msra.mxu0 %v67
    %118 = vmatmul.f32.gmra.mxu0 %v100
    %v119 = vpop.f32.mrf.mxu0
    %v120 = vadd.f32 0.0, %v119
    %121 = vdwg.mxu0
    %v122 = vmax.f32 %v120, 1e-30
    %v123 = vrsqrt.pop %v122
    %v124 = vmul.f32 %v123, %v122
    %v125 = vmul.f32 %v124, %v123
    %v126 = vmul.f32 0.5, %v125
    %v127 = vsub.f32 1.5, %v126
    %v128 = vmul.f32 %v123, %v127
    %vm129 = vweird.f32 %v122
    %vm130 = vweird.f32 %v123
    %vm131 = vmor %vm129, %vm130
    %v132 = vsel %vm131, %v123, %v128
    %v133 = vmul.f32 %v122, %v132
    %v134 = vmul.f32 %v93, %v132
    %v135 = vmul.f32 %v134, -0.5
    %v136 = vmul.f32 %v135, %v134
    %v137 = vmul.f32 %v136, 1.442695
    %v138 = vpow.pop %v137
    %v139 = vmul.f32 %v138, 0.3989423
    %v140 = vmul.f32 %v134, 0.70710677
    %v141 = vmul.f32 %v140, %v140
    %v142 = vmin.f32 16.0, %v141
    %v143 = vmul.f32 %v142, 2.1237322e-06
    %v144 = vadd.f32 %v143, 0.00028619796
    %v145 = vmul.f32 %v142, %v144
    %v146 = vadd.f32 %v145, 0.0036580483
    %v147 = vmul.f32 %v142, %v146
    %v148 = vadd.f32 %v147, 0.05243302
    %v149 = vmul.f32 %v142, %v148
    %v150 = vadd.f32 %v149, 0.18741608
    %v151 = vmul.f32 %v142, %v150
    %v152 = vadd.f32 %v151, 1.1283791
    %v153 = vmul.f32 %v140, %v152
    %v154 = vmul.f32 %v142, 3.8918573e-05
    %v155 = vadd.f32 %v154, 0.001143296
    %v156 = vmul.f32 %v142, %v155
    %v157 = vadd.f32 %v156, 0.014752088
    %v158 = vmul.f32 %v142, %v157
    %v159 = vadd.f32 %v158, 0.112945676
    %v160 = vmul.f32 %v142, %v159
    %v161 = vadd.f32 %v160, 0.4994258
    %v162 = vmul.f32 %v142, %v161
    %v163 = vadd.f32 %v162, 1.0
    %v164 = vrcp.pop %v163
    %v165 = vmul.f32 %v163, %v164
    %v166 = vsub.f32 1.0, %v165
    %v167 = vmul.f32 %v164, %v166
    %v168 = vadd.f32 %v164, %v167
    %vm169 = vweird.f32 %v163
    %vm170 = vweird.f32 %v164
    %vm171 = vmor %vm169, %vm170
    %v172 = vsel %vm171, %v164, %v168
    %v173 = vand.u32 2147483647, %v163
    %vm174 = vcmp.eq.f32.partialorder %v173, 8.507059e+37
    %v175 = vand.u32 %v163, 2147483648
    %v176 = vor.u32 1.1754944e-38, %v175
    %v177 = vsel %vm174, %v176, %v172
    %v178 = vmul.f32 %v153, %v177
    %v179 = vmin.f32 %v178, 1.0
    %v180 = vmax.f32 %v179, -1.0
    %v181 = vadd.f32 %v180, 1.0
    %v182 = vmul.f32 %v181, 0.5
    %v183 = vmul.f32 %v93, %v182
    %v184 = vmul.f32 %v133, %v139
    %v185 = vadd.f32 %v183, %v184
    %v186 = vmul.f32 %v93, %v93
    %v187 = vadd.f32 %v186, %v120
    %v188 = vmul.f32 %v187, %v182
    %v189 = vmul.f32 %v93, %v133
    %v190 = vmul.f32 %v189, %v139
    %v191 = vadd.f32 %v188, %v190
    %v192 = vmul.f32 %v185, %v185
    %v193 = vsub.f32 %v191, %v192
    %194 = vst [vmem:[#allocation8] sm:$0xff] %v185
    %v195 = vmax.f32 %v193, 0.001
    %196 = vst [vmem:[#allocation9] sm:$0xff] %v195
    // Predicated region
    $region26: #{tpu_custom_call.1} parent=1 // pred_check
      _
    $region27: #{tpu_custom_call.1} parent=1 // pred_check_branch
      %198 = sbr.rel (0) target = $region29
    $region28: #{tpu_custom_call.1} parent=1 // pred_region
      %200 = vsyncadd [#allocation4], 0
      %s202 = sshll.u32 [#allocation8], 4
      %s203 = int_to_ptr.vmem [resolvable:$true] %s202
      %s204 = sshll.u32 %s3, 4
      %s205 = int_to_ptr.hbm [resolvable:$true] %s204
      %207 = dma.vmem_to_hbm [thread:$0]  %s203, 128, %s205, [#allocation4]
    $region29: #{tpu_custom_call.1} parent=1 // pred_fallthru
      _
    // Predicated region
    $region30: #{tpu_custom_call.1} parent=1 // pred_check
      _
    $region31: #{tpu_custom_call.1} parent=1 // pred_check_branch
      %209 = sbr.rel (0) target = $region33
    $region32: #{tpu_custom_call.1} parent=1 // pred_region
      %211 = vsyncadd [#allocation10], 0
      %s213 = sshll.u32 [#allocation9], 4
      %s214 = int_to_ptr.vmem [resolvable:$true] %s213
      %s215 = sshll.u32 %s4, 4
      %s216 = int_to_ptr.hbm [resolvable:$true] %s215
      %218 = dma.vmem_to_hbm [thread:$0]  %s214, 128, %s216, [#allocation10]
    $region33: #{tpu_custom_call.1} parent=1 // pred_fallthru
      _
    // Predicated region
    $region34: #{tpu_custom_call.1} parent=1 // pred_check
      _
    $region35: #{tpu_custom_call.1} parent=1 // pred_check_branch
      %220 = sbr.rel (0) target = $region37
    $region36: #{tpu_custom_call.1} parent=1 // pred_region
      %222 = dma.done [#allocation4], 128
    $region37: #{tpu_custom_call.1} parent=1 // pred_fallthru
      _
    // Predicated region
    $region38: #{tpu_custom_call.1} parent=1 // pred_check
      _
    $region39: #{tpu_custom_call.1} parent=1 // pred_check_branch
      %224 = sbr.rel (0) target = $region41
    $region40: #{tpu_custom_call.1} parent=1 // pred_region
      %226 = dma.done [#allocation10], 128
    $region41: #{tpu_custom_call.1} parent=1 // pred_fallthru
      _
    %227 = vsyncpa [#allocation3], 1
    %228 = vsyncpa [#allocation6], 1
    %229 = vsyncpa [#allocation4], 1
    %230 = vsyncpa [#allocation10], 1

</llo_original>
